<compile_context>
chip_gen: v5e
topology: v5e:2x2
jax: 0.10.0
libtpu: 0.0.40
codegen_flags: <defaults>
</compile_context>

<pallas_src>
import functools

import jax
import jax.numpy as jnp
from jax.experimental import pallas as pl
from jax.experimental.pallas import tpu as pltpu

LANES = 128


def _dice_partials_kernel(pr_ref, gt_ref, out_ref, *, tile_rows, n_valid, needs_mask):
    """Writes per-block partial sums [tp, sum(pr), sum(gt)] as (1, 3, 128)."""
    pr = jax.nn.sigmoid(pr_ref[...].astype(jnp.float32))
    gt = gt_ref[...].astype(jnp.float32)

    if needs_mask:
        # Mask out lane-pad / out-of-bounds rows in the (only) tail block.
        i = pl.program_id(0)
        row = jax.lax.broadcasted_iota(jnp.int32, pr.shape, 0)
        lane = jax.lax.broadcasted_iota(jnp.int32, pr.shape, 1)
        elem = (i * tile_rows + row) * LANES + lane
        mask = elem < n_valid
        pr = jnp.where(mask, pr, 0.0)
        gt = jnp.where(mask, gt, 0.0)

    out_ref[0, 0:1, :] = jnp.sum(pr * gt, axis=0, keepdims=True)
    out_ref[0, 1:2, :] = jnp.sum(pr, axis=0, keepdims=True)
    out_ref[0, 2:3, :] = jnp.sum(gt, axis=0, keepdims=True)


def _dice_partial_sums(pr2d, gt2d, tile_rows, n_valid):
    rows = pr2d.shape[0]
    # Don't use a block taller than the (8-row aligned) array itself.
    tr = min(tile_rows, ((rows + 7) // 8) * 8)
    grid_g = pl.cdiv(rows, tr)
    needs_mask = (grid_g * tr * LANES) != n_valid

    kernel = functools.partial(
        _dice_partials_kernel, tile_rows=tr, n_valid=n_valid, needs_mask=needs_mask
    )

    return pl.pallas_call(
        kernel,
        out_shape=jax.ShapeDtypeStruct((grid_g, 3, LANES), jnp.float32),
        grid_spec=pltpu.PrefetchScalarGridSpec(
            num_scalar_prefetch=0,
            grid=(grid_g,),
            in_specs=[
                pl.BlockSpec((tr, LANES), lambda i: (i, 0)),
                pl.BlockSpec((tr, LANES), lambda i: (i, 0)),
            ],
            # Each grid step owns its own output block -> no cross-step deps,
            # grid can be sharded across TensorCores (v7x megacore).
            out_specs=pl.BlockSpec((1, 3, LANES), lambda i: (i, 0, 0)),
        ),
        compiler_params=pltpu.CompilerParams(
            dimension_semantics=("parallel",),
        ),
    )(pr2d, gt2d)


@functools.partial(jax.jit, static_argnames=("eps", "tile_rows"))
def dice_loss(y_pr, y_gt, eps=1e-7, tile_rows=1024):
    """DiceLoss forward. y_pr are logits (activation='sigmoid'), y_gt targets.

    Inputs are consumed in their native dtype; all casting happens in-kernel.
    For tile_rows >> 4096 on v5e/v7x, pass vmem_limit_bytes via CompilerParams.
    """
    n = y_pr.size
    pr_flat = y_pr.reshape(-1)
    gt_flat = y_gt.reshape(-1)

    # Only pad the (rare) <128-element lane tail; a reshape of a contiguous
    # flat array to (rows, 128) is otherwise free. Pad values are masked out
    # inside the kernel, so zeros are fine.
    lane_pad = (-n) % LANES
    if lane_pad:
        # TODO(synk): tiny copy only when total size isn't a multiple of 128.
        pr_flat = jnp.pad(pr_flat, (0, lane_pad))
        gt_flat = jnp.pad(gt_flat, (0, lane_pad))

    rows = pr_flat.size // LANES
    pr2d = pr_flat.reshape(rows, LANES)
    gt2d = gt_flat.reshape(rows, LANES)

    partials = _dice_partial_sums(pr2d, gt2d, tile_rows, n)  # (G, 3, 128)
    sums = jnp.sum(partials, axis=(0, 2))                    # (3,)
    tp, pr_sum, gt_sum = sums[0], sums[1], sums[2]
    fp = pr_sum - tp
    fn = gt_sum - tp

    beta2 = 1.0  # beta = 1.0 in DiceLoss
    score = ((1.0 + beta2) * tp + eps) / ((1.0 + beta2) * tp + beta2 * fn + fp + eps)
    return 1.0 - score


if __name__ == "__main__":
    key = jax.random.PRNGKey(0)
    k1, k2 = jax.random.split(key)

    # NCHW, matching the PyTorch convention: batch=2, channels=4, spatial=16.
    y_pr = jax.random.normal(k1, (2, 4, 16, 16), dtype=jnp.float32)            # logits
    y_gt = (jax.random.uniform(k2, (2, 4, 16, 16)) > 0.5).astype(jnp.float32)  # {0,1} mask

    loss = dice_loss(y_pr, y_gt)
    loss = jax.block_until_ready(loss)

    # Pure-JAX reference check of the same semantics.
    pr = jax.nn.sigmoid(y_pr)
    tp = jnp.sum(pr * y_gt)
    fp = jnp.sum(pr) - tp
    fn = jnp.sum(y_gt) - tp
    eps = 1e-7
    ref = 1.0 - (2.0 * tp + eps) / (2.0 * tp + fn + fp + eps)

    assert jnp.allclose(loss, ref, atol=1e-6, rtol=1e-6), (loss, ref)
    print("KERNEL_OK")
</pallas_src>

<mosaic_0001>
module attributes {stable_mosaic.version = 11 : i64} {
  func.func @_dice_partials_kernel(%arg0: i32, %arg1: memref<16x128xf32, #tpu.memory_space<vmem>>, %arg2: memref<16x128xf32, #tpu.memory_space<vmem>>, %arg3: memref<1x3x128xf32, #tpu.memory_space<vmem>>) attributes {dimension_semantics = [#tpu.dimension_semantics<parallel>], iteration_bounds = array<i64: 1>, scalar_prefetch = 0 : i64, scratch_operands = 0 : i64, tpu.core_type = #tpu.core_type<tc>, window_params = [{transform_indices = @transform_0, window_bounds = array<i64: 16, 128>}, {transform_indices = @transform_1, window_bounds = array<i64: 16, 128>}, {transform_indices = @transform_2, window_bounds = array<i64: 1, 3, 128>}]} {
    %c0 = arith.constant 0 : index
    %c0_0 = arith.constant 0 : index
    %0 = vector.load %arg1[%c0, %c0_0] : memref<16x128xf32, #tpu.memory_space<vmem>>, vector<16x128xf32>
    %1 = arith.negf %0 : vector<16x128xf32>
    %2 = math.exp %1 : vector<16x128xf32>
    %cst = arith.constant 1.000000e+00 : f32
    %3 = vector.broadcast %cst : f32 to vector<16x128xf32>
    %4 = arith.addf %3, %2 : vector<16x128xf32>
    %5 = arith.divf %3, %4 : vector<16x128xf32>
    %c0_1 = arith.constant 0 : index
    %c0_2 = arith.constant 0 : index
    %6 = vector.load %arg2[%c0_1, %c0_2] : memref<16x128xf32, #tpu.memory_space<vmem>>, vector<16x128xf32>
    %7 = arith.mulf %5, %6 : vector<16x128xf32>
    %cst_3 = arith.constant dense<0.000000e+00> : vector<128xf32>
    %8 = vector.multi_reduction <add>, %7, %cst_3 [0] : vector<16x128xf32> to vector<128xf32>
    %9 = vector.shape_cast %8 : vector<128xf32> to vector<1x128xf32>
    %c0_4 = arith.constant 0 : index
    %c0_5 = arith.constant 0 : index
    %c0_6 = arith.constant 0 : index
    %10 = vector.load %arg3[%c0_4, %c0_5, %c0_6] : memref<1x3x128xf32, #tpu.memory_space<vmem>>, vector<1x1x128xf32>
    %11 = vector.shape_cast %10 : vector<1x1x128xf32> to vector<1x128xf32>
    %12 = vector.shape_cast %9 : vector<1x128xf32> to vector<1x1x128xf32>
    tpu.vector_store %arg3[%c0_4, %c0_5, %c0_6], %12 {strides = array<i32>} : memref<1x3x128xf32, #tpu.memory_space<vmem>>, vector<1x1x128xf32>,
    %cst_7 = arith.constant dense<0.000000e+00> : vector<128xf32>
    %13 = vector.multi_reduction <add>, %5, %cst_7 [0] : vector<16x128xf32> to vector<128xf32>
    %14 = vector.shape_cast %13 : vector<128xf32> to vector<1x128xf32>
    %c0_8 = arith.constant 0 : index
    %c1 = arith.constant 1 : index
    %c0_9 = arith.constant 0 : index
    %15 = vector.load %arg3[%c0_8, %c1, %c0_9] : memref<1x3x128xf32, #tpu.memory_space<vmem>>, vector<1x1x128xf32>
    %16 = vector.shape_cast %15 : vector<1x1x128xf32> to vector<1x128xf32>
    %17 = vector.shape_cast %14 : vector<1x128xf32> to vector<1x1x128xf32>
    tpu.vector_store %arg3[%c0_8, %c1, %c0_9], %17 {strides = array<i32>} : memref<1x3x128xf32, #tpu.memory_space<vmem>>, vector<1x1x128xf32>,
    %cst_10 = arith.constant dense<0.000000e+00> : vector<128xf32>
    %18 = vector.multi_reduction <add>, %6, %cst_10 [0] : vector<16x128xf32> to vector<128xf32>
    %19 = vector.shape_cast %18 : vector<128xf32> to vector<1x128xf32>
    %c0_11 = arith.constant 0 : index
    %c2 = arith.constant 2 : index
    %c0_12 = arith.constant 0 : index
    %20 = vector.load %arg3[%c0_11, %c2, %c0_12] : memref<1x3x128xf32, #tpu.memory_space<vmem>>, vector<1x1x128xf32>
    %21 = vector.shape_cast %20 : vector<1x1x128xf32> to vector<1x128xf32>
    %22 = vector.shape_cast %19 : vector<1x128xf32> to vector<1x1x128xf32>
    tpu.vector_store %arg3[%c0_11, %c2, %c0_12], %22 {strides = array<i32>} : memref<1x3x128xf32, #tpu.memory_space<vmem>>, vector<1x1x128xf32>,
    return
  }
  func.func @transform_0(%arg0: i32) -> (i32, i32) {
    %c0_i32 = arith.constant 0 : i32
    %c0_i32_0 = arith.constant 0 : i32
    return %arg0, %c0_i32 : i32, i32
  }
  func.func @transform_1(%arg0: i32) -> (i32, i32) {
    %c0_i32 = arith.constant 0 : i32
    %c0_i32_0 = arith.constant 0 : i32
    return %arg0, %c0_i32 : i32, i32
  }
  func.func @transform_2(%arg0: i32) -> (i32, i32, i32) {
    %c0_i32 = arith.constant 0 : i32
    %c0_i32_0 = arith.constant 0 : i32
    %c0_i32_1 = arith.constant 0 : i32
    return %arg0, %c0_i32, %c0_i32_0 : i32, i32, i32
  }
}

</mosaic_0001>

<llo_original>
// kernel: dice_loss.1
$region0: #{dice_loss.1}
  #allocation0 [shape = 'u32[]', space=smem, size = 0x4, offset = 0x4, fixed_abs, tag = 'smem constant byte address 0x4 - core index']
  #allocation1 [shape = 'u32[72,128]{1,0:T(1,128)}', space=vmem, size = 0x9000, scoped, tag = 'internal scratch']
  %s0 = inlined_call_operand.vmem [shape: f32[16,128], index: 0, kind: input, shape index: {}]
  %s1 = inlined_call_operand.vmem [shape: f32[16,128], index: 1, kind: input, shape index: {}]
  %s2 = inlined_call_operand.vmem [shape: f32[1,3,128], index: 2, kind: output, shape index: {}]
  %s3 = sld [smem:[#allocation0]]
  $region18: #{dice_loss.1} parent=0
    _
  %s5 = ssub.s32 1, %s3
  %s6 = scalar_select 0, %s5, %s3
  // Predicated region
  $region2: #{dice_loss.1} parent=0 // pred_check
    _
  $region3: #{dice_loss.1} parent=0 // pred_check_branch
    %8 = sbr.rel (0) target = $region5
  $region4: #{dice_loss.1} parent=0 // pred_region
    _
  $region5: #{dice_loss.1} parent=0 // pred_fallthru
    _
  // Predicated region
  $region6: #{dice_loss.1} parent=0 // pred_check
    _
  $region7: #{dice_loss.1} parent=0 // pred_check_branch
    %10 = sbr.rel (0) target = $region9
  $region8: #{dice_loss.1} parent=0 // pred_region
    _
  $region9: #{dice_loss.1} parent=0 // pred_fallthru
    _
  %v11 = vld [vmem:[%s0] sm:$0xff]
  %v12 = vld [vmem:[%s0 + $0x8] sm:$0xff]
  %v13 = vxor.u32 %v11, 2147483648
  %v14 = vxor.u32 %v12, 2147483648
  %v15 = vmul.f32 %v13, 1.442695
  %v16 = vpow.pop %v15
  %v17 = vmul.f32 %v14, 1.442695
  %v18 = vpow.pop %v17
  %v19 = vadd.f32 %v16, 1.0
  %v20 = vadd.f32 %v18, 1.0
  %v21 = vrcp.pop %v19
  %v22 = vmul.f32 %v19, %v21
  %v23 = vsub.f32 1.0, %v22
  %v24 = vmul.f32 %v21, %v23
  %v25 = vadd.f32 %v21, %v24
  %vm26 = vweird.f32 %v19
  %vm27 = vweird.f32 %v21
  %vm28 = vmor %vm26, %vm27
  %v29 = vsel %vm28, %v21, %v25
  %v30 = vand.u32 2147483647, %v19
  %vm31 = vcmp.eq.f32.partialorder %v30, 8.507059e+37
  %v32 = vand.u32 %v19, 2147483648
  %v33 = vor.u32 1.1754944e-38, %v32
  %v34 = vsel %vm31, %v33, %v29
  %v35 = vmul.f32 1.0, %v34
  %v36 = vrcp.pop %v20
  %v37 = vmul.f32 %v20, %v36
  %v38 = vsub.f32 1.0, %v37
  %v39 = vmul.f32 %v36, %v38
  %v40 = vadd.f32 %v36, %v39
  %vm41 = vweird.f32 %v20
  %vm42 = vweird.f32 %v36
  %vm43 = vmor %vm41, %vm42
  %v44 = vsel %vm43, %v36, %v40
  %v45 = vand.u32 2147483647, %v20
  %vm46 = vcmp.eq.f32.partialorder %v45, 8.507059e+37
  %v47 = vand.u32 %v20, 2147483648
  %v48 = vor.u32 1.1754944e-38, %v47
  %v49 = vsel %vm46, %v48, %v44
  %v50 = vmul.f32 1.0, %v49
  %v51 = vld [vmem:[%s1] sm:$0xff]
  %v52 = vld [vmem:[%s1 + $0x8] sm:$0xff]
  %v53 = vmul.f32 %v35, %v51
  %v54 = vmul.f32 %v50, %v52
  %v55 = vadd.f32 %v53, %v54
  %v56 = vrot.slane %v55, 4
  %v57 = vadd.f32 %v55, %v56
  %v58 = vrot.slane %v57, 2
  %v59 = vadd.f32 %v57, %v58
  %v60 = vrot.slane %v59, 1
  %v61 = vadd.f32 %v59, %v60
  %62 = vst [vmem:[%s2] sm:$0x1] %v61
  %v63 = vadd.f32 %v35, %v50
  %v64 = vrot.slane %v63, 4
  %v65 = vadd.f32 %v63, %v64
  %v66 = vrot.slane %v65, 2
  %v67 = vadd.f32 %v65, %v66
  %v68 = vrot.slane %v67, 1
  %v69 = vadd.f32 %v67, %v68
  %70 = vst [vmem:[%s2 + $0x1] sm:$0x1] %v69
  %v71 = vadd.f32 %v51, %v52
  %v72 = vrot.slane %v71, 4
  %v73 = vadd.f32 %v71, %v72
  %v74 = vrot.slane %v73, 2
  %v75 = vadd.f32 %v73, %v74
  %v76 = vrot.slane %v75, 1
  %v77 = vadd.f32 %v75, %v76
  %78 = vst [vmem:[%s2 + $0x2] sm:$0x1] %v77
  // Predicated region
  $region10: #{dice_loss.1} parent=0 // pred_check
    _
  $region11: #{dice_loss.1} parent=0 // pred_check_branch
    %80 = sbr.rel (0) target = $region13
  $region12: #{dice_loss.1} parent=0 // pred_region
    _
  $region13: #{dice_loss.1} parent=0 // pred_fallthru
    _
  // Predicated region
  $region14: #{dice_loss.1} parent=0 // pred_check
    _
  $region15: #{dice_loss.1} parent=0 // pred_check_branch
    %82 = sbr.rel (0) target = $region17
  $region16: #{dice_loss.1} parent=0 // pred_region
    _
  $region17: #{dice_loss.1} parent=0 // pred_fallthru
    _

</llo_original>
